<compile_context>
chip_gen: v7x
topology: tpu7x:2x2x1
jax: 0.10.0
libtpu: 0.0.40
codegen_flags: <defaults>
</compile_context>

<pallas_src>
import math

import jax
import jax.numpy as jnp
from jax.experimental import pallas as pl
from jax.experimental.pallas import tpu as pltpu


def _round_up(x, m):
    return ((x + m - 1) // m) * m


def _linear_k2_kernel(x_ref, w_ref, b_ref, o_ref):
    # y = x @ w + b with tiny K: do it on the VPU (2 vmul + 2 vadd per vreg)
    # instead of a >95%-zero-padded MXU matmul. The kernel stays store-bound,
    # so this just removes MXU latency from each tile's critical path.
    x = x_ref[...].astype(jnp.float32)          # [TM, K]
    w = w_ref[...].astype(jnp.float32)          # [K,  D]
    b = b_ref[...].astype(jnp.float32)          # [1,  D] (sublane-broadcast add)
    k = w.shape[0]                              # static (= 2)
    acc = x[:, 0:1] * w[0:1, :]
    for i in range(1, k):
        acc = acc + x[:, i:i + 1] * w[i:i + 1, :]
    o_ref[...] = (acc + b).astype(o_ref.dtype)


def spline_feature_embedding(x, weight, bias):
    """x: [..., 2]; weight: [d_model, 2]; bias: [d_model] -> [..., d_model]."""
    d_model, in_dim = weight.shape
    leading = x.shape[:-1]
    m = 1
    for s in leading:
        m *= s

    # Lane-dense output: pad D to a multiple of 128 so stores are unmasked vst.
    d_pad = _round_up(d_model, 128)
    w_t = weight.T                              # [K, D]
    b2d = bias.reshape(1, d_model)              # [1, D]
    if d_pad != d_model:
        w_t = jnp.pad(w_t, ((0, 0), (0, d_pad - d_model)))
        b2d = jnp.pad(b2d, ((0, 0), (0, d_pad - d_model)))

    x2d = x.reshape(m, in_dim)

    # Row tile: ~4 MiB output tile (x2 double buffers = 8 MiB) stays well under
    # the scoped-VMEM defaults on v5e/v6e/v7x; multiple of 8 (f32 sublane).
    target_tile_bytes = 4 * 1024 * 1024
    tm = max(8, (target_tile_bytes // (d_pad * 4)) // 8 * 8)
    tm = min(tm, _round_up(m, 8))
    grid = (pl.cdiv(m, tm),)

    cost = pl.CostEstimate(
        flops=2 * m * in_dim * d_pad + m * d_pad,
        transcendentals=0,
        bytes_accessed=4 * (m * in_dim + in_dim * d_pad + d_pad + m * d_pad),
    )

    out = pl.pallas_call(
        _linear_k2_kernel,
        out_shape=jax.ShapeDtypeStruct((m, d_pad), x.dtype),
        grid_spec=pltpu.PrefetchScalarGridSpec(
            num_scalar_prefetch=0,
            grid=grid,
            in_specs=[
                pl.BlockSpec((tm, in_dim), lambda i: (i, 0)),     # streamed rows
                pl.BlockSpec((in_dim, d_pad), lambda i: (0, 0)),  # resident weight
                pl.BlockSpec((1, d_pad), lambda i: (0, 0)),       # resident bias
            ],
            out_specs=pl.BlockSpec((tm, d_pad), lambda i: (i, 0)),
        ),
        compiler_params=pltpu.CompilerParams(
            dimension_semantics=("parallel",),   # shard row tiles across TCs on v7x
        ),
        cost_estimate=cost,
    )(x2d, w_t, b2d)

    if d_pad != d_model:
        out = out[:, :d_model]
    return out.reshape(*leading, d_model)


def init_params(key, d_model, input_dim=2):
    # nn.Linear default init: U(-1/sqrt(fan_in), 1/sqrt(fan_in)).
    kw, kb = jax.random.split(key)
    bound = 1.0 / math.sqrt(input_dim)
    weight = jax.random.uniform(kw, (d_model, input_dim), jnp.float32, -bound, bound)
    bias = jax.random.uniform(kb, (d_model,), jnp.float32, -bound, bound)
    return weight, bias


if __name__ == "__main__":
    key = jax.random.PRNGKey(0)
    k_x, k_p = jax.random.split(key)

    batch, seq, input_dim, d_model = 2, 8, 2, 32
    x = jax.random.normal(k_x, (batch, seq, input_dim), jnp.float32)
    weight, bias = init_params(k_p, d_model, input_dim)

    y = spline_feature_embedding(x, weight, bias)
    y = jax.block_until_ready(y)

    # reference check
    y_ref = x @ weight.T + bias
    assert y.shape == (batch, seq, d_model)
    assert jnp.allclose(y, y_ref, atol=1e-5, rtol=1e-5)

    print("KERNEL_OK")
</pallas_src>

<mosaic_0001>
module attributes {stable_mosaic.version = 11 : i64} {
  func.func @_linear_k2_kernel(%arg0: i32, %arg1: memref<16x2xf32, #tpu.memory_space<vmem>>, %arg2: memref<2x128xf32, #tpu.memory_space<vmem>>, %arg3: memref<1x128xf32, #tpu.memory_space<vmem>>, %arg4: memref<16x128xf32, #tpu.memory_space<vmem>>) attributes {dimension_semantics = [#tpu.dimension_semantics<parallel>], iteration_bounds = array<i64: 1>, scalar_prefetch = 0 : i64, scratch_operands = 0 : i64, tpu.core_type = #tpu.core_type<tc>, window_params = [{transform_indices = @transform_0, window_bounds = array<i64: 16, 2>}, {pipeline_mode = #tpu.pipeline_mode<synchronous>, transform_indices = @transform_1, window_bounds = array<i64: 2, 128>}, {pipeline_mode = #tpu.pipeline_mode<synchronous>, transform_indices = @transform_2, window_bounds = array<i64: 1, 128>}, {transform_indices = @transform_3, window_bounds = array<i64: 16, 128>}]} {
    %c0 = arith.constant 0 : index
    %c0_0 = arith.constant 0 : index
    %0 = vector.load %arg1[%c0, %c0_0] : memref<16x2xf32, #tpu.memory_space<vmem>>, vector<16x2xf32>
    %c0_1 = arith.constant 0 : index
    %c0_2 = arith.constant 0 : index
    %1 = vector.load %arg2[%c0_1, %c0_2] : memref<2x128xf32, #tpu.memory_space<vmem>>, vector<2x128xf32>
    %c0_3 = arith.constant 0 : index
    %c0_4 = arith.constant 0 : index
    %2 = vector.load %arg3[%c0_3, %c0_4] : memref<1x128xf32, #tpu.memory_space<vmem>>, vector<1x128xf32>
    %3 = vector.extract_strided_slice %0 {offsets = [0, 0], sizes = [16, 1], strides = [1, 1]} : vector<16x2xf32> to vector<16x1xf32>
    %4 = vector.extract_strided_slice %1 {offsets = [0, 0], sizes = [1, 128], strides = [1, 1]} : vector<2x128xf32> to vector<1x128xf32>
    %5 = vector.broadcast %3 : vector<16x1xf32> to vector<16x128xf32>
    %6 = vector.broadcast %4 : vector<1x128xf32> to vector<16x128xf32>
    %7 = arith.mulf %5, %6 : vector<16x128xf32>
    %8 = vector.extract_strided_slice %0 {offsets = [0, 1], sizes = [16, 1], strides = [1, 1]} : vector<16x2xf32> to vector<16x1xf32>
    %9 = vector.extract_strided_slice %1 {offsets = [1, 0], sizes = [1, 128], strides = [1, 1]} : vector<2x128xf32> to vector<1x128xf32>
    %10 = vector.broadcast %8 : vector<16x1xf32> to vector<16x128xf32>
    %11 = vector.broadcast %9 : vector<1x128xf32> to vector<16x128xf32>
    %12 = arith.mulf %10, %11 : vector<16x128xf32>
    %13 = arith.addf %7, %12 : vector<16x128xf32>
    %14 = vector.broadcast %2 : vector<1x128xf32> to vector<16x128xf32>
    %15 = arith.addf %13, %14 : vector<16x128xf32>
    %c0_5 = arith.constant 0 : index
    %c0_6 = arith.constant 0 : index
    %16 = vector.load %arg4[%c0_5, %c0_6] : memref<16x128xf32, #tpu.memory_space<vmem>>, vector<16x128xf32>
    tpu.vector_store %arg4[%c0_5, %c0_6], %15 {strides = array<i32>} : memref<16x128xf32, #tpu.memory_space<vmem>>, vector<16x128xf32>,
    return
  }
  func.func @transform_0(%arg0: i32) -> (i32, i32) {
    %c0_i32 = arith.constant 0 : i32
    %c0_i32_0 = arith.constant 0 : i32
    return %arg0, %c0_i32 : i32, i32
  }
  func.func @transform_1(%arg0: i32) -> (i32, i32) {
    %c0_i32 = arith.constant 0 : i32
    %c0_i32_0 = arith.constant 0 : i32
    %c0_i32_1 = arith.constant 0 : i32
    return %c0_i32, %c0_i32_0 : i32, i32
  }
  func.func @transform_2(%arg0: i32) -> (i32, i32) {
    %c0_i32 = arith.constant 0 : i32
    %c0_i32_0 = arith.constant 0 : i32
    %c0_i32_1 = arith.constant 0 : i32
    return %c0_i32, %c0_i32_0 : i32, i32
  }
  func.func @transform_3(%arg0: i32) -> (i32, i32) {
    %c0_i32 = arith.constant 0 : i32
    %c0_i32_0 = arith.constant 0 : i32
    return %arg0, %c0_i32 : i32, i32
  }
}

</mosaic_0001>

<llo_original>
// kernel: tpu_custom_call.1
$region0: #{tpu_custom_call.1}
  #allocation0 [shape = 'u32[]', space=smem, size = 0x4, offset = 0x4, fixed_abs, tag = 'smem constant byte address 0x4 - core index']
  #allocation1 [shape = 'u32[144,128]{1,0:T(1,128)}', space=vmem, size = 0x12000, scoped, tag = 'internal scratch']
  %s0 = inlined_call_operand.vmem [shape: f32[16,2], index: 0, kind: input, shape index: {}]
  %s1 = inlined_call_operand.vmem [shape: f32[2,128], index: 1, kind: input, shape index: {}]
  %s2 = inlined_call_operand.vmem [shape: f32[1,128], index: 2, kind: input, shape index: {}]
  %s3 = inlined_call_operand.hbm [shape: f32[16,128], index: 3, kind: output, shape index: {}]
  %s4 = sld [smem:[#allocation0]]
  $region22: #{tpu_custom_call.1} parent=0
    _
  %s6 = ssub.s32 1, %s4
  %s7 = scalar_select 0, %s6, %s4
  $region1: #{tpu_custom_call.1} parent=0
    #allocation2 [shape = 'u8[8192]{0}', space=vmem, size = 0x2000, scoped, tag = 'output window, operand 0, single buffered']
    #allocation3 [shape = 's32[1]{0}', space=sflag, size = 0x4, scoped, tag = 'scoped memory for tpu_custom_call.1']
    %8 = vsyncpa [#allocation3], 0
    // Predicated region
    $region2: #{tpu_custom_call.1} parent=1 // pred_check
      _
    $region3: #{tpu_custom_call.1} parent=1 // pred_check_branch
      %10 = sbr.rel (0) target = $region5
    $region4: #{tpu_custom_call.1} parent=1 // pred_region
      _
    $region5: #{tpu_custom_call.1} parent=1 // pred_fallthru
      _
    // Predicated region
    $region6: #{tpu_custom_call.1} parent=1 // pred_check
      _
    $region7: #{tpu_custom_call.1} parent=1 // pred_check_branch
      %12 = sbr.rel (0) target = $region9
    $region8: #{tpu_custom_call.1} parent=1 // pred_region
      _
    $region9: #{tpu_custom_call.1} parent=1 // pred_fallthru
      _
    // Predicated region
    $region10: #{tpu_custom_call.1} parent=1 // pred_check
      _
    $region11: #{tpu_custom_call.1} parent=1 // pred_check_branch
      %14 = sbr.rel (0) target = $region13
    $region12: #{tpu_custom_call.1} parent=1 // pred_region
      _
    $region13: #{tpu_custom_call.1} parent=1 // pred_fallthru
      _
    %v15 = vld [vmem:[%s0] sm:$0xff]
    %v16 = vld [vmem:[%s0 + $0x8] sm:$0xff]
    %v17 = vld [vmem:[%s1] sm:$0x3]
    %v18 = vld [vmem:[%s2] sm:$0x1]
    %20 = vset.pattern.permute.xlu0 0
    %21 = vperm.xlu0 %20, %v15
    %v22 = vpop.permute.xlu0 %21
    %25 = vset.pattern.permute.xlu0 0
    %26 = vperm.xlu0 %25, %v16
    %v27 = vpop.permute.xlu0 %26
    %v29 = vlaneseq
    %v30 = vshrl.u32 %v29, 7
    %v31 = vsub.s32 0, %v30
    %v32 = vrot.slane %v17, %v31
    %v33 = vmul.f32 %v22, %v32
    %v34 = vmul.f32 %v27, %v32
    %35 = vset.pattern.permute.xlu0 1
    %36 = vperm.xlu0 %35, %v15
    %v37 = vpop.permute.xlu0 %36
    %39 = vset.pattern.permute.xlu0 1
    %40 = vperm.xlu0 %39, %v16
    %v41 = vpop.permute.xlu0 %40
    %v43 = vlaneseq
    %v44 = vshrl.u32 %v43, 7
    %v45 = vsub.s32 1, %v44
    %v46 = vrot.slane %v17, %v45
    %v47 = vmul.f32 %v37, %v46
    %v48 = vmul.f32 %v41, %v46
    %v49 = vadd.f32 %v33, %v47
    %v50 = vadd.f32 %v34, %v48
    %v52 = vlaneseq
    %v53 = vshrl.u32 %v52, 7
    %v54 = vsub.s32 0, %v53
    %v55 = vrot.slane %v18, %v54
    %v57 = vadd.f32 %v49, %v55
    %v58 = vadd.f32 %v50, %v55
    %59 = vst [vmem:[#allocation2] sm:$0xff] %v57
    %60 = vst [vmem:[#allocation2 + $0x8] sm:$0xff] %v58
    // Predicated region
    $region14: #{tpu_custom_call.1} parent=1 // pred_check
      _
    $region15: #{tpu_custom_call.1} parent=1 // pred_check_branch
      %62 = sbr.rel (0) target = $region17
    $region16: #{tpu_custom_call.1} parent=1 // pred_region
      %s64 = ssub.s32 256, 256
      %65 = vsyncadd [#allocation3], %s64
      %s66 = sshll.u32 [#allocation2], 4
      %s67 = int_to_ptr.vmem [resolvable:$true] %s66
      %72 = dma.vmem_to_hbm [thread:$0]  %s67, 256, %s3, [#allocation3], 128, 128, 8
    $region17: #{tpu_custom_call.1} parent=1 // pred_fallthru
      _
    // Predicated region
    $region18: #{tpu_custom_call.1} parent=1 // pred_check
      _
    $region19: #{tpu_custom_call.1} parent=1 // pred_check_branch
      %74 = sbr.rel (0) target = $region21
    $region20: #{tpu_custom_call.1} parent=1 // pred_region
      %75 = dma.done [#allocation3], 256
    $region21: #{tpu_custom_call.1} parent=1 // pred_fallthru
      _
    %76 = vsyncpa [#allocation3], 1

</llo_original>
